<compile_context>
chip_gen: v6e
topology: v6e:2x2x1
jax: 0.10.0
libtpu: 0.0.40
codegen_flags: <defaults>
</compile_context>

<pallas_src>
import math

import jax
import jax.numpy as jnp
from jax import lax
from jax.experimental import pallas as pl
from jax.experimental.pallas import tpu as pltpu


def _positional_encoding_2d(h, w, org_channels):
    """JAX port of positional_encodings.PositionalEncoding2D on a zero input.

    Returns (h, w, org_channels) float32 (the library returns just the encoding,
    broadcast over the batch dim, which here is the latent channel dim C).
    """
    channels = int(math.ceil(org_channels / 4) * 2)
    inv_freq = 1.0 / (10000.0 ** (jnp.arange(0, channels, 2, dtype=jnp.float32) / channels))
    pos_x = jnp.arange(h, dtype=jnp.float32)
    pos_y = jnp.arange(w, dtype=jnp.float32)
    sin_inp_x = jnp.einsum("i,j->ij", pos_x, inv_freq)            # (h, channels//2)
    sin_inp_y = jnp.einsum("i,j->ij", pos_y, inv_freq)            # (w, channels//2)
    emb_x = jnp.stack([jnp.sin(sin_inp_x), jnp.cos(sin_inp_x)], axis=-1).reshape(h, channels)
    emb_y = jnp.stack([jnp.sin(sin_inp_y), jnp.cos(sin_inp_y)], axis=-1).reshape(w, channels)
    emb = jnp.zeros((h, w, 2 * channels), dtype=jnp.float32)
    emb = emb.at[:, :, :channels].set(emb_x[:, None, :])
    emb = emb.at[:, :, channels:2 * channels].set(emb_y[None, :, :])
    return emb[:, :, :org_channels]                               # (h, w, org_channels)


def _round_up(x, m):
    return -(-x // m) * m


def _fused_kernel(x_ref, pos_ref, w_ref, y_ref):
    """y = sum_c w[c] * x[c] + pos over one lane-dense (bt, st) slab.

    x_ref  : (C, bt, st) f32 VMEM  stride-2-subsampled encoder latent,
                                   channel-major -> x_ref[c] is a contiguous,
                                   sublane-aligned (bt, st) slab.
    pos_ref: (bt, st)    f32 VMEM  pre-gathered, pre-scaled positional term
                                   (w_sum * pos[cls] + bias), computed in wrapper.
    w_ref  : (C,)        f32 SMEM  Conv2d(6,1,1,stride=2) channel weights.
    y_ref  : (bt, st)    f32 VMEM  output slab.
    """
    c_dim = x_ref.shape[0]
    acc = w_ref[0] * x_ref[0]                 # whole-slab VPU MAC (full sublanes)
    for c in range(1, c_dim):                 # static unroll over small C (=6)
        acc = acc + w_ref[c] * x_ref[c]
    y_ref[...] = acc + pos_ref[...]


def dual_embedder_pos_forward(img, cls_lab, params, n_classes=5,
                              batch_tile=128, spatial_tile=1024):
    # ---- encoder: out = self.model(img) ------------------------------------
    # TODO(synk): torch.load('auto_kl_encoder.pkl') (pretrained KL autoencoder)
    # cannot be reproduced; replaced by a deterministic stride-2 conv stand-in
    # producing the expected (B, 6, H, W) latent.  This is glue, not the kernel.
    out = lax.conv_general_dilated(
        img, params["enc_w"], window_strides=(2, 2), padding=((1, 1), (1, 1)),
        dimension_numbers=("NCHW", "OIHW", "NCHW"))
    out = out + params["enc_b"][None, :, None, None]              # (B, C, H, W)

    B, C, H, W = out.shape
    Ho = (H - 1) // 2 + 1
    Wo = (W - 1) // 2 + 1
    HoWo = Ho * Wo

    # ---- stride-2 spatial pick in the wrapper (4x less HBM traffic) ---------
    # NOTE: for an HBM-BW-bound stream this could additionally be cast to bf16
    # and upcast to f32 inside the kernel for another ~2x; kept f32 here.
    out_sub = out[:, :, ::2, ::2].reshape(B, C, HoWo).astype(jnp.float32)
    x_cm = jnp.transpose(out_sub, (1, 0, 2))                      # (C, B, HoWo) channel-major

    # ---- pre-gathered, pre-scaled positional term + bias ---------------------
    penc = _positional_encoding_2d(H, W, n_classes)               # (H, W, n_cls)
    pos_sub = jnp.transpose(penc, (2, 0, 1))[:, ::2, ::2]         # (n_cls, Ho, Wo)
    pos_sub = pos_sub.reshape(n_classes, HoWo).astype(jnp.float32)
    w_s = params["out_w"].reshape(C).astype(jnp.float32)          # Conv2d(6,1,1) weight
    b_s = params["out_b"].reshape(()).astype(jnp.float32)         # Conv2d(6,1,1) bias
    w_sum = jnp.sum(w_s)
    # NOTE: clip keeps the gather bounds-safe; out-of-range labels are remapped
    # silently (the PyTorch reference would raise instead).
    cls = jnp.clip(cls_lab.astype(jnp.int32), 0, n_classes - 1)
    pos_b = w_sum * pos_sub[cls] + b_s                            # (B, HoWo)

    # ---- tile sizing: sublane-aligned batch tiles, lane-dense spatial tiles --
    b_pad8 = _round_up(B, 8)
    bt = min(batch_tile, b_pad8)
    if bt == b_pad8 and b_pad8 >= 16:
        bt = _round_up(b_pad8 // 2, 8)        # >=2 batch tiles -> both v7x TCs get work
    b_pad = _round_up(b_pad8, bt)

    sp128 = _round_up(HoWo, 128)              # lane-dense last dim (unmasked vst)
    st = min(spatial_tile, sp128)
    sp_pad = _round_up(HoWo, st)

    x_cm = jnp.pad(x_cm, ((0, 0), (0, b_pad - B), (0, sp_pad - HoWo)))
    pos_b = jnp.pad(pos_b, ((0, b_pad - B), (0, sp_pad - HoWo)))

    n_bt = b_pad // bt
    n_st = sp_pad // st

    # Per-step VMEM (double-buffered): (C + 2) * bt * st * 4B * 2  ~= 8 MiB at
    # the defaults -> comfortably under the 32 MiB scoped default on all gens.
    y = pl.pallas_call(
        _fused_kernel,
        out_shape=jax.ShapeDtypeStruct((b_pad, sp_pad), jnp.float32),
        grid=(n_bt, n_st),
        in_specs=[
            pl.BlockSpec((C, bt, st), lambda i, j: (0, i, j)),            # latent (channel-major)
            pl.BlockSpec((bt, st), lambda i, j: (i, j)),                  # pos + bias slab
            pl.BlockSpec(memory_space=pltpu.MemorySpace.SMEM),            # conv weight (C,)
        ],
        out_specs=pl.BlockSpec((bt, st), lambda i, j: (i, j)),
        compiler_params=pltpu.CompilerParams(
            dimension_semantics=("parallel", "parallel")),
    )(x_cm, pos_b, w_s)

    # final .view(B, 1, Ho*Wo) -> pure metadata, done in plain JAX
    return y[:B, :HoWo].reshape(B, 1, HoWo)


if __name__ == "__main__":
    key = jax.random.PRNGKey(0)
    k1, k2, k3, k4, k5, k6 = jax.random.split(key, 6)

    B, Cin, Himg, Wimg = 2, 3, 32, 32
    C, n_classes = 6, 5

    img = jax.random.normal(k1, (B, Cin, Himg, Wimg), dtype=jnp.float32)
    cls_lab = jax.random.randint(k2, (B,), 0, n_classes, dtype=jnp.int32)

    params = {
        # deterministic stand-in encoder conv (3 -> 6, k=3, s=2, p=1)
        "enc_w": 0.1 * jax.random.normal(k3, (C, Cin, 3, 3), dtype=jnp.float32),
        "enc_b": 0.1 * jax.random.normal(k4, (C,), dtype=jnp.float32),
        # out_layer = nn.Conv2d(6, 1, 1, stride=2) weights (deterministic init)
        "out_w": jax.random.normal(k5, (1, C, 1, 1), dtype=jnp.float32),
        "out_b": jax.random.normal(k6, (1,), dtype=jnp.float32),
    }

    y = dual_embedder_pos_forward(img, cls_lab, params, n_classes=n_classes)
    y = jax.block_until_ready(y)

    # ---- pure-JAX reference for the Pallas-covered portion ------------------
    out = lax.conv_general_dilated(
        img, params["enc_w"], (2, 2), ((1, 1), (1, 1)),
        dimension_numbers=("NCHW", "OIHW", "NCHW"))
    out = out + params["enc_b"][None, :, None, None]
    H, W = out.shape[2], out.shape[3]
    penc = _positional_encoding_2d(H, W, n_classes)
    pos_full = jnp.transpose(penc, (2, 0, 1))                     # (n_cls, H, W)
    fin = out + pos_full[cls_lab][:, None, :, :]                  # broadcast along C
    ref = jnp.einsum("bchw,c->bhw", fin[:, :, ::2, ::2],
                     params["out_w"].reshape(C)) + params["out_b"][0]
    ref = ref.reshape(B, 1, -1)

    assert y.shape == ref.shape, (y.shape, ref.shape)
    assert jnp.allclose(y, ref, rtol=1e-5, atol=5e-5), float(jnp.max(jnp.abs(y - ref)))
    print("KERNEL_OK")
</pallas_src>

<mosaic_0001>
module attributes {stable_mosaic.version = 11 : i64} {
  func.func @_fused_kernel(%arg0: i32, %arg1: i32, %arg2: memref<6x8x128xf32, #tpu.memory_space<vmem>>, %arg3: memref<8x128xf32, #tpu.memory_space<vmem>>, %arg4: memref<6xf32, #tpu.memory_space<smem>>, %arg5: memref<8x128xf32, #tpu.memory_space<vmem>>) attributes {dimension_semantics = [#tpu.dimension_semantics<parallel>, #tpu.dimension_semantics<parallel>], iteration_bounds = array<i64: 1, 1>, scalar_prefetch = 0 : i64, scratch_operands = 0 : i64, tpu.core_type = #tpu.core_type<tc>, window_params = [{transform_indices = @transform_0, window_bounds = array<i64: 6, 8, 128>}, {transform_indices = @transform_1, window_bounds = array<i64: 8, 128>}, {transform_indices = @transform_2, window_bounds = array<i64: 6>}, {transform_indices = @transform_3, window_bounds = array<i64: 8, 128>}]} {
    %c0 = arith.constant 0 : index
    %0 = memref.load %arg4[%c0] : memref<6xf32, #tpu.memory_space<smem>>
    %c0_0 = arith.constant 0 : index
    %c0_1 = arith.constant 0 : index
    %c0_2 = arith.constant 0 : index
    %1 = vector.load %arg2[%c0_0, %c0_1, %c0_2] : memref<6x8x128xf32, #tpu.memory_space<vmem>>, vector<1x8x128xf32>
    %2 = vector.shape_cast %1 : vector<1x8x128xf32> to vector<8x128xf32>
    %3 = vector.broadcast %0 : f32 to vector<8x128xf32>
    %4 = arith.mulf %3, %2 : vector<8x128xf32>
    %c1 = arith.constant 1 : index
    %5 = memref.load %arg4[%c1] : memref<6xf32, #tpu.memory_space<smem>>
    %c1_3 = arith.constant 1 : index
    %c0_4 = arith.constant 0 : index
    %c0_5 = arith.constant 0 : index
    %6 = vector.load %arg2[%c1_3, %c0_4, %c0_5] : memref<6x8x128xf32, #tpu.memory_space<vmem>>, vector<1x8x128xf32>
    %7 = vector.shape_cast %6 : vector<1x8x128xf32> to vector<8x128xf32>
    %8 = vector.broadcast %5 : f32 to vector<8x128xf32>
    %9 = arith.mulf %8, %7 : vector<8x128xf32>
    %10 = arith.addf %4, %9 : vector<8x128xf32>
    %c2 = arith.constant 2 : index
    %11 = memref.load %arg4[%c2] : memref<6xf32, #tpu.memory_space<smem>>
    %c2_6 = arith.constant 2 : index
    %c0_7 = arith.constant 0 : index
    %c0_8 = arith.constant 0 : index
    %12 = vector.load %arg2[%c2_6, %c0_7, %c0_8] : memref<6x8x128xf32, #tpu.memory_space<vmem>>, vector<1x8x128xf32>
    %13 = vector.shape_cast %12 : vector<1x8x128xf32> to vector<8x128xf32>
    %14 = vector.broadcast %11 : f32 to vector<8x128xf32>
    %15 = arith.mulf %14, %13 : vector<8x128xf32>
    %16 = arith.addf %10, %15 : vector<8x128xf32>
    %c3 = arith.constant 3 : index
    %17 = memref.load %arg4[%c3] : memref<6xf32, #tpu.memory_space<smem>>
    %c3_9 = arith.constant 3 : index
    %c0_10 = arith.constant 0 : index
    %c0_11 = arith.constant 0 : index
    %18 = vector.load %arg2[%c3_9, %c0_10, %c0_11] : memref<6x8x128xf32, #tpu.memory_space<vmem>>, vector<1x8x128xf32>
    %19 = vector.shape_cast %18 : vector<1x8x128xf32> to vector<8x128xf32>
    %20 = vector.broadcast %17 : f32 to vector<8x128xf32>
    %21 = arith.mulf %20, %19 : vector<8x128xf32>
    %22 = arith.addf %16, %21 : vector<8x128xf32>
    %c4 = arith.constant 4 : index
    %23 = memref.load %arg4[%c4] : memref<6xf32, #tpu.memory_space<smem>>
    %c4_12 = arith.constant 4 : index
    %c0_13 = arith.constant 0 : index
    %c0_14 = arith.constant 0 : index
    %24 = vector.load %arg2[%c4_12, %c0_13, %c0_14] : memref<6x8x128xf32, #tpu.memory_space<vmem>>, vector<1x8x128xf32>
    %25 = vector.shape_cast %24 : vector<1x8x128xf32> to vector<8x128xf32>
    %26 = vector.broadcast %23 : f32 to vector<8x128xf32>
    %27 = arith.mulf %26, %25 : vector<8x128xf32>
    %28 = arith.addf %22, %27 : vector<8x128xf32>
    %c5 = arith.constant 5 : index
    %29 = memref.load %arg4[%c5] : memref<6xf32, #tpu.memory_space<smem>>
    %c5_15 = arith.constant 5 : index
    %c0_16 = arith.constant 0 : index
    %c0_17 = arith.constant 0 : index
    %30 = vector.load %arg2[%c5_15, %c0_16, %c0_17] : memref<6x8x128xf32, #tpu.memory_space<vmem>>, vector<1x8x128xf32>
    %31 = vector.shape_cast %30 : vector<1x8x128xf32> to vector<8x128xf32>
    %32 = vector.broadcast %29 : f32 to vector<8x128xf32>
    %33 = arith.mulf %32, %31 : vector<8x128xf32>
    %34 = arith.addf %28, %33 : vector<8x128xf32>
    %c0_18 = arith.constant 0 : index
    %c0_19 = arith.constant 0 : index
    %35 = vector.load %arg3[%c0_18, %c0_19] : memref<8x128xf32, #tpu.memory_space<vmem>>, vector<8x128xf32>
    %36 = arith.addf %34, %35 : vector<8x128xf32>
    %c0_20 = arith.constant 0 : index
    %c0_21 = arith.constant 0 : index
    %37 = vector.load %arg5[%c0_20, %c0_21] : memref<8x128xf32, #tpu.memory_space<vmem>>, vector<8x128xf32>
    tpu.vector_store %arg5[%c0_20, %c0_21], %36 {strides = array<i32>} : memref<8x128xf32, #tpu.memory_space<vmem>>, vector<8x128xf32>,
    return
  }
  func.func @transform_0(%arg0: i32, %arg1: i32) -> (i32, i32, i32) {
    %c0_i32 = arith.constant 0 : i32
    %c0_i32_0 = arith.constant 0 : i32
    return %c0_i32, %arg0, %arg1 : i32, i32, i32
  }
  func.func @transform_1(%arg0: i32, %arg1: i32) -> (i32, i32) {
    %c0_i32 = arith.constant 0 : i32
    return %arg0, %arg1 : i32, i32
  }
  func.func @transform_2(%arg0: i32, %arg1: i32) -> i32 {
    %c0_i32 = arith.constant 0 : i32
    %c0_i32_0 = arith.constant 0 : i32
    return %c0_i32 : i32
  }
  func.func @transform_3(%arg0: i32, %arg1: i32) -> (i32, i32) {
    %c0_i32 = arith.constant 0 : i32
    return %arg0, %arg1 : i32, i32
  }
}

</mosaic_0001>

<llo_original>
// kernel: tpu_custom_call.1
$region0: #{tpu_custom_call.1}
  #allocation0 [shape = 'u32[]', space=smem, size = 0x4, offset = 0x4, fixed_abs, tag = 'smem constant byte address 0x4 - core index']
  #allocation1 [shape = 'u32[144,128]{1,0:T(1,128)}', space=vmem, size = 0x12000, scoped, tag = 'internal scratch']
  %s0 = inlined_call_operand.hbm [shape: f32[6,8,128], index: 0, kind: input, shape index: {}]
  %s1 = inlined_call_operand.hbm [shape: f32[8,128], index: 1, kind: input, shape index: {}]
  %s2 = inlined_call_operand.vmem [shape: f32[6], index: 2, kind: input, shape index: {}]
  %s3 = inlined_call_operand.hbm [shape: f32[8,128], index: 3, kind: output, shape index: {}]
  %s4 = sld [smem:[#allocation0]]
  $region34: #{tpu_custom_call.1} parent=0
    _
  %s6 = ssub.s32 1, %s4
  %s7 = scalar_select 0, %s6, %s4
  $region1: #{tpu_custom_call.1} parent=0
    #allocation2 [shape = 'u8[24576]{0}', space=vmem, size = 0x6000, scoped, tag = 'input window, operand 0, single buffered']
    #allocation3 [shape = 's32[1]{0}', space=sflag, size = 0x4, scoped, tag = 'scoped memory for tpu_custom_call.1']
    #allocation4 [shape = 's32[1]{0}', space=sflag, size = 0x4, scoped, tag = 'scoped memory for tpu_custom_call.1']
    #allocation5 [shape = 's32[1]{0}', space=sflag, size = 0x4, scoped, tag = 'scoped memory for tpu_custom_call.1']
    #allocation6 [shape = 'u8[4096]{0}', space=vmem, size = 0x1000, scoped, tag = 'input window, operand 1, single buffered']
    #allocation7 [shape = 's32[1]{0}', space=sflag, size = 0x4, scoped, tag = 'scoped memory for tpu_custom_call.1']
    #allocation8 [shape = 'u8[512]{0}', space=smem, size = 0x200, scoped, tag = 'input window, operand 2, single buffered']
    #allocation9 [shape = 'u8[4096]{0}', space=vmem, size = 0x1000, scoped, tag = 'output window, operand 0, single buffered']
    %8 = vsyncpa [#allocation3], 0
    %9 = vsyncpa [#allocation7], 0
    %10 = vsyncpa [#allocation5], 0
    %11 = vsyncpa [#allocation4], 0
    // Predicated region
    $region2: #{tpu_custom_call.1} parent=1 // pred_check
      _
    $region3: #{tpu_custom_call.1} parent=1 // pred_check_branch
      %13 = sbr.rel (0) target = $region5
    $region4: #{tpu_custom_call.1} parent=1 // pred_region
      %s15 = ssub.s32 768, 768
      %16 = vsyncadd [#allocation3], %s15
      %s17 = sshll.u32 [#allocation2], 4
      %s18 = int_to_ptr.vmem [resolvable:$true] %s17
      %23 = dma.hbm_to_vmem [thread:$0]  %s0, 768, %s18, [#allocation3], 128, 128, 8
    $region5: #{tpu_custom_call.1} parent=1 // pred_fallthru
      _
    // Predicated region
    $region6: #{tpu_custom_call.1} parent=1 // pred_check
      _
    $region7: #{tpu_custom_call.1} parent=1 // pred_check_branch
      %25 = sbr.rel (0) target = $region9
    $region8: #{tpu_custom_call.1} parent=1 // pred_region
      %s27 = ssub.s32 128, 128
      %28 = vsyncadd [#allocation7], %s27
      %s30 = sshll.u32 [#allocation6], 4
      %s31 = int_to_ptr.vmem [resolvable:$true] %s30
      %33 = dma.hbm_to_vmem [thread:$0]  %s1, 128, %s31, [#allocation7]
    $region9: #{tpu_custom_call.1} parent=1 // pred_fallthru
      _
    // Predicated region
    $region10: #{tpu_custom_call.1} parent=1 // pred_check
      _
    $region11: #{tpu_custom_call.1} parent=1 // pred_check_branch
      %35 = sbr.rel (0) target = $region13
    $region12: #{tpu_custom_call.1} parent=1 // pred_region
      %s37 = ssub.s32 16, 16
      %38 = vsyncadd [#allocation5], %s37
      %s40 = sshll.u32 %s2, 4
      %s41 = int_to_ptr.vmem [resolvable:$true] %s40
      %43 = dma.vmem_to_smem %s41, 16, [#allocation8], [#allocation5]
    $region13: #{tpu_custom_call.1} parent=1 // pred_fallthru
      _
    // Predicated region
    $region14: #{tpu_custom_call.1} parent=1 // pred_check
      _
    $region15: #{tpu_custom_call.1} parent=1 // pred_check_branch
      %45 = sbr.rel (0) target = $region17
    $region16: #{tpu_custom_call.1} parent=1 // pred_region
      %46 = dma.done [#allocation3], 768
    $region17: #{tpu_custom_call.1} parent=1 // pred_fallthru
      _
    // Predicated region
    $region18: #{tpu_custom_call.1} parent=1 // pred_check
      _
    $region19: #{tpu_custom_call.1} parent=1 // pred_check_branch
      %48 = sbr.rel (0) target = $region21
    $region20: #{tpu_custom_call.1} parent=1 // pred_region
      %49 = dma.done [#allocation7], 128
    $region21: #{tpu_custom_call.1} parent=1 // pred_fallthru
      _
    // Predicated region
    $region22: #{tpu_custom_call.1} parent=1 // pred_check
      _
    $region23: #{tpu_custom_call.1} parent=1 // pred_check_branch
      %51 = sbr.rel (0) target = $region25
    $region24: #{tpu_custom_call.1} parent=1 // pred_region
      %52 = dma.done [#allocation5], 16
    $region25: #{tpu_custom_call.1} parent=1 // pred_fallthru
      _
    %53 = sfence
    %s54 = sld [smem:[#allocation8]]
    %v55 = vld [vmem:[#allocation2] sm:$0xff]
    %v56 = vstv %s54
    %v57 = vmul.f32 %v56, %v55
    %s58 = sld [smem:[#allocation8 + $0x1]]
    %s59 = scalar_lea.vmem [#allocation2], 8
    %v60 = vld [vmem:[%s59] sm:$0xff]
    %v61 = vstv %s58
    %v62 = vmul.f32 %v61, %v60
    %v63 = vadd.f32 %v57, %v62
    %s64 = sld [smem:[#allocation8 + $0x2]]
    %s65 = scalar_lea.vmem [#allocation2], 16
    %v66 = vld [vmem:[%s65] sm:$0xff]
    %v67 = vstv %s64
    %v68 = vmul.f32 %v67, %v66
    %v69 = vadd.f32 %v63, %v68
    %s70 = sld [smem:[#allocation8 + $0x3]]
    %s71 = scalar_lea.vmem [#allocation2], 24
    %v72 = vld [vmem:[%s71] sm:$0xff]
    %v73 = vstv %s70
    %v74 = vmul.f32 %v73, %v72
    %v75 = vadd.f32 %v69, %v74
    %s76 = sld [smem:[#allocation8 + $0x4]]
    %s77 = scalar_lea.vmem [#allocation2], 32
    %v78 = vld [vmem:[%s77] sm:$0xff]
    %v79 = vstv %s76
    %v80 = vmul.f32 %v79, %v78
    %v81 = vadd.f32 %v75, %v80
    %s82 = sld [smem:[#allocation8 + $0x5]]
    %s83 = scalar_lea.vmem [#allocation2], 40
    %v84 = vld [vmem:[%s83] sm:$0xff]
    %v85 = vstv %s82
    %v86 = vmul.f32 %v85, %v84
    %v87 = vadd.f32 %v81, %v86
    %v88 = vld [vmem:[#allocation6] sm:$0xff]
    %v89 = vadd.f32 %v87, %v88
    %90 = vst [vmem:[#allocation9] sm:$0xff] %v89
    // Predicated region
    $region26: #{tpu_custom_call.1} parent=1 // pred_check
      _
    $region27: #{tpu_custom_call.1} parent=1 // pred_check_branch
      %92 = sbr.rel (0) target = $region29
    $region28: #{tpu_custom_call.1} parent=1 // pred_region
      %s94 = ssub.s32 128, 128
      %95 = vsyncadd [#allocation4], %s94
      %s97 = sshll.u32 [#allocation9], 4
      %s98 = int_to_ptr.vmem [resolvable:$true] %s97
      %100 = dma.vmem_to_hbm [thread:$0]  %s98, 128, %s3, [#allocation4]
    $region29: #{tpu_custom_call.1} parent=1 // pred_fallthru
      _
    // Predicated region
    $region30: #{tpu_custom_call.1} parent=1 // pred_check
      _
    $region31: #{tpu_custom_call.1} parent=1 // pred_check_branch
      %102 = sbr.rel (0) target = $region33
    $region32: #{tpu_custom_call.1} parent=1 // pred_region
      %103 = dma.done [#allocation4], 128
    $region33: #{tpu_custom_call.1} parent=1 // pred_fallthru
      _
    %104 = vsyncpa [#allocation3], 1
    %105 = vsyncpa [#allocation7], 1
    %106 = vsyncpa [#allocation4], 1
    %107 = vsyncpa [#allocation5], 1

</llo_original>
